<compile_context>
chip_gen: v7x
topology: tpu7x:2x2x1
jax: 0.10.0
libtpu: 0.0.40
codegen_flags: <defaults>
</compile_context>

<pallas_src>
import functools

import jax
import jax.numpy as jnp
from jax.experimental import pallas as pl
from jax.experimental.pallas import tpu as pltpu

EPS = 1e-6


def _elu_plus_one(x):
    # elu(x) + 1 == x + 1 if x > 0 else exp(x)
    return jnp.where(x > 0, x + 1.0, jnp.exp(x))


def _round_up(x, m):
    return -(-x // m) * m


def _pick_s_tile(s, max_tile):
    """Sublane-aligned S tile; S is padded (and masked) up to a tile multiple."""
    if s <= max_tile:
        return _round_up(s, 8)
    n_tiles = -(-s // max_tile)
    return _round_up(-(-s // n_tiles), 8)


def _pick_l_tile(l, max_tile):
    if l <= max_tile:
        return l
    for tl in range(max_tile, 7, -8):          # multiples of 8 only
        if l % tl == 0:
            return tl
    # TODO(synk): pad-and-mask L for lengths with no aligned divisor.
    return l


def _vmem_cap_bytes():
    try:
        return int(pltpu.get_tpu_info().vmem_capacity_bytes)
    except Exception:
        return 64 * 2**20                       # conservative (v7x per-TC)


def _vmem_bytes_estimate(tl, ts, HD, itemsize, has_q_mask, has_kv_mask):
    def padded(r, c):
        return (-(-r // 8) * 8) * (-(-c // 128) * 128)

    b = 2 * padded(tl, HD) * itemsize            # q (double-buffered)
    b += 2 * 2 * padded(ts, HD) * itemsize       # k, v
    b += 2 * padded(tl, HD) * itemsize           # out
    b += 2 * padded(HD, HD) * 2                  # head mask (bf16, resident)
    if has_q_mask:
        b += 2 * padded(tl, 1) * 4
    if has_kv_mask:
        b += 2 * padded(ts, 1) * 4
    b += padded(HD, HD) * 4 + padded(1, HD) * 4  # f32 accumulators
    return b


def _linear_attention_kernel(*refs, eps, has_q_mask, has_kv_mask):
    it = iter(refs)
    hm_ref = next(it)                   # (HD, HD) bf16 block-diagonal 0/1
    q_ref = next(it)                    # (1, tl, HD)
    k_ref = next(it)                    # (1, ts, HD)
    v_ref = next(it)                    # (1, ts, HD)
    qm_ref = next(it) if has_q_mask else None
    kvm_ref = next(it) if has_kv_mask else None
    o_ref = next(it)                    # (1, tl, HD)
    kv_acc = next(it)                   # (HD, HD) f32
    ks_acc = next(it)                   # (1, HD) f32

    si = pl.program_id(2)
    ns = pl.num_programs(2)

    @pl.when(si == 0)
    def _init():
        kv_acc[...] = jnp.zeros_like(kv_acc)
        ks_acc[...] = jnp.zeros_like(ks_acc)

    # ---- accumulate KV (bf16 MXU / f32 acc) and the K row-sum over this tile
    k = k_ref[0].astype(jnp.float32)
    v = v_ref[0].astype(jnp.float32)
    kf = _elu_plus_one(k)
    if has_kv_mask:
        kvm = kvm_ref[0].astype(jnp.float32)      # (ts, 1): mask + S padding
        kf = kf * kvm
        v = v * kvm

    contract_s = (((0,), (0,)), ((), ()))          # contract S; no explicit kf.T
    kv_acc[...] += jax.lax.dot_general(
        kf.astype(jnp.bfloat16), v.astype(jnp.bfloat16), contract_s,
        preferred_element_type=jnp.float32)
    ks_acc[...] += jnp.sum(kf, axis=0, keepdims=True)   # (1, HD), cheap reduce

    # ---- finalize on the last S tile ---------------------------------------
    @pl.when(si == ns - 1)
    def _finish():
        q = q_ref[0].astype(jnp.float32)
        qf = _elu_plus_one(q)
        if has_q_mask:
            qf = qf * qm_ref[0].astype(jnp.float32)

        hm = hm_ref[...]                                   # 0/1, exact in bf16
        kv_bd = kv_acc[...].astype(jnp.bfloat16) * hm      # zero cross-head blocks
        num = jnp.dot(qf.astype(jnp.bfloat16), kv_bd,
                      preferred_element_type=jnp.float32)           # (tl, HD)
        # Per-head denominator, broadcast across the head's value lanes:
        # den[l, h*D+v] = sum_d qf[l, h*D+d] * Ksum[h*D+d]
        den = jnp.dot((qf * ks_acc[...]).astype(jnp.bfloat16), hm,
                      preferred_element_type=jnp.float32)           # (tl, HD)
        # Exact divide (epilogue-only, tiny): approx reciprocal cost accuracy.
        o_ref[0] = (num / (den + jnp.float32(eps))).astype(o_ref.dtype)


def linear_attention(queries, keys, values, q_mask=None, kv_mask=None,
                     eps=EPS, max_s_tile=2048, max_l_tile=1024):
    """queries: [N, L, H, D]; keys/values: [N, S, H, D]; masks: [N, L]/[N, S]."""
    N, L, H, D = queries.shape
    _, S, _, _ = keys.shape
    HD = H * D

    # Lane-dense [*, H*D] layout: contiguous last-two-dim merge is free.
    q2 = queries.reshape(N, L, HD)
    k2 = keys.reshape(N, S, HD)
    v2 = values.reshape(N, S, HD)

    ts = _pick_s_tile(S, max_s_tile)
    num_s = -(-S // ts)
    s_pad = num_s * ts - S
    tl = _pick_l_tile(L, max_l_tile)
    num_l = L // tl

    has_q_mask = q_mask is not None
    has_kv_mask = (kv_mask is not None) or (s_pad > 0)

    if s_pad > 0:
        k2 = jnp.pad(k2, ((0, 0), (0, s_pad), (0, 0)))
        v2 = jnp.pad(v2, ((0, 0), (0, s_pad), (0, 0)))
    if has_kv_mask:
        kvm = kv_mask if kv_mask is not None else jnp.ones((N, S), jnp.float32)
        if s_pad > 0:
            kvm = jnp.pad(kvm, ((0, 0), (0, s_pad)))     # padded tail masked out
        kvm = kvm.reshape(N, S + s_pad, 1)

    # Block-diagonal head mask, built once and kept VMEM-resident.
    head = jnp.arange(HD, dtype=jnp.int32) // D
    head_mask = (head[:, None] == head[None, :]).astype(jnp.bfloat16)

    inputs = [head_mask, q2, k2, v2]
    in_specs = [
        pl.BlockSpec((HD, HD), lambda n, l, s: (0, 0)),
        pl.BlockSpec((1, tl, HD), lambda n, l, s: (n, l, 0)),
        pl.BlockSpec((1, ts, HD), lambda n, l, s: (n, s, 0)),
        pl.BlockSpec((1, ts, HD), lambda n, l, s: (n, s, 0)),
    ]
    if has_q_mask:
        inputs.append(q_mask.reshape(N, L, 1))
        in_specs.append(pl.BlockSpec((1, tl, 1), lambda n, l, s: (n, l, 0)))
    if has_kv_mask:
        inputs.append(kvm)
        in_specs.append(pl.BlockSpec((1, ts, 1), lambda n, l, s: (n, s, 0)))

    itemsize = jnp.dtype(queries.dtype).itemsize
    est = _vmem_bytes_estimate(tl, ts, HD, itemsize, has_q_mask, has_kv_mask)
    cap = _vmem_cap_bytes()
    vmem_limit = int(min(max(32 * 2**20, cap - 16 * 2**20),
                         max(32 * 2**20, 2 * est)))

    kernel = functools.partial(
        _linear_attention_kernel, eps=eps,
        has_q_mask=has_q_mask, has_kv_mask=has_kv_mask)

    out = pl.pallas_call(
        kernel,
        out_shape=jax.ShapeDtypeStruct((N, L, HD), queries.dtype),
        grid_spec=pltpu.PrefetchScalarGridSpec(
            num_scalar_prefetch=0,
            grid=(N, num_l, num_s),
            in_specs=in_specs,
            out_specs=pl.BlockSpec((1, tl, HD), lambda n, l, s: (n, l, 0)),
            scratch_shapes=[
                pltpu.VMEM((HD, HD), jnp.float32),   # KV accumulator
                pltpu.VMEM((1, HD), jnp.float32),    # K-sum row accumulator
            ],
        ),
        compiler_params=pltpu.CompilerParams(
            dimension_semantics=("parallel", "parallel", "arbitrary"),
            vmem_limit_bytes=vmem_limit),
    )(*inputs)

    return out.reshape(N, L, H, D)


def _reference(queries, keys, values, q_mask=None, kv_mask=None, eps=EPS):
    hp = jax.lax.Precision.HIGHEST
    Q = jax.nn.elu(queries) + 1.0
    K = jax.nn.elu(keys) + 1.0
    if q_mask is not None:
        Q = Q * q_mask[:, :, None, None]
    if kv_mask is not None:
        K = K * kv_mask[:, :, None, None]
        values = values * kv_mask[:, :, None, None]
    v_length = values.shape[1]
    values = values / v_length
    KV = jnp.einsum('nshd,nshv->nhdv', K, values, precision=hp)
    Z = 1.0 / (jnp.einsum('nlhd,nhd->nlh', Q, K.sum(axis=1), precision=hp) + eps)
    return jnp.einsum('nlhd,nhdv,nlh->nlhv', Q, KV, Z, precision=hp) * v_length


if __name__ == "__main__":
    key = jax.random.PRNGKey(0)
    N, L, S, H, D = 2, 8, 8, 4, 32
    kq, kk, kv_, kqm, kkm = jax.random.split(key, 5)

    queries = jax.random.normal(kq, (N, L, H, D), dtype=jnp.float32)
    keys = jax.random.normal(kk, (N, S, H, D), dtype=jnp.float32)
    values = jax.random.normal(kv_, (N, S, H, D), dtype=jnp.float32)
    q_mask = (jax.random.uniform(kqm, (N, L)) > 0.2).astype(jnp.float32)
    kv_mask = (jax.random.uniform(kkm, (N, S)) > 0.2).astype(jnp.float32)

    # bf16 MXU operands with f32 accumulation -> ~1e-3-level relative error vs
    # the HIGHEST-precision f32 reference; 1e-2 is the standard bf16 tolerance.
    def check(out, ref, name):
        assert out.shape == ref.shape, name
        err = float(jnp.max(jnp.abs(out - ref)))
        assert jnp.allclose(out, ref, atol=1e-2, rtol=1e-2), (
            f"{name}: max abs err {err}")

    # 1) masked path
    out = jax.block_until_ready(
        linear_attention(queries, keys, values, q_mask, kv_mask))
    check(out, _reference(queries, keys, values, q_mask, kv_mask), "masked")

    # 2) maskless fast path (no mask arrays allocated / DMA'd)
    out = jax.block_until_ready(linear_attention(queries, keys, values))
    check(out, _reference(queries, keys, values), "maskless")

    # 3) multi-tile S reduction + L tiling + padded (non-tile-multiple) S
    L2, S2 = 16, 20
    kq2, kk2, kv2, kkm2 = jax.random.split(jax.random.PRNGKey(1), 4)
    q_b = jax.random.normal(kq2, (N, L2, H, D), dtype=jnp.float32)
    k_b = jax.random.normal(kk2, (N, S2, H, D), dtype=jnp.float32)
    v_b = jax.random.normal(kv2, (N, S2, H, D), dtype=jnp.float32)
    kvm_b = (jax.random.uniform(kkm2, (N, S2)) > 0.3).astype(jnp.float32)
    out = jax.block_until_ready(
        linear_attention(q_b, k_b, v_b, kv_mask=kvm_b,
                         max_s_tile=8, max_l_tile=8))
    check(out, _reference(q_b, k_b, v_b, kv_mask=kvm_b), "tiled+padded")

    print("KERNEL_OK")
</pallas_src>

<mosaic_0001>
module attributes {stable_mosaic.version = 11 : i64} {
  func.func @_linear_attention_kernel(%arg0: i32, %arg1: i32, %arg2: i32, %arg3: memref<128x128xbf16, #tpu.memory_space<vmem>>, %arg4: memref<1x8x128xf32, #tpu.memory_space<vmem>>, %arg5: memref<1x8x128xf32, #tpu.memory_space<vmem>>, %arg6: memref<1x8x128xf32, #tpu.memory_space<vmem>>, %arg7: memref<1x8x1xf32, #tpu.memory_space<vmem>>, %arg8: memref<1x8x1xf32, #tpu.memory_space<vmem>>, %arg9: memref<1x8x128xf32, #tpu.memory_space<vmem>>, %arg10: memref<128x128xf32, #tpu.memory_space<vmem>>, %arg11: memref<1x128xf32, #tpu.memory_space<vmem>>) attributes {dimension_semantics = [#tpu.dimension_semantics<parallel>, #tpu.dimension_semantics<parallel>, #tpu.dimension_semantics<arbitrary>], iteration_bounds = array<i64: 2, 1, 1>, scalar_prefetch = 0 : i64, scratch_operands = 2 : i64, tpu.core_type = #tpu.core_type<tc>, window_params = [{pipeline_mode = #tpu.pipeline_mode<synchronous>, transform_indices = @transform_0, window_bounds = array<i64: 128, 128>}, {transform_indices = @transform_1, window_bounds = array<i64: 1, 8, 128>}, {transform_indices = @transform_2, window_bounds = array<i64: 1, 8, 128>}, {transform_indices = @transform_3, window_bounds = array<i64: 1, 8, 128>}, {transform_indices = @transform_4, window_bounds = array<i64: 1, 8, 1>}, {transform_indices = @transform_5, window_bounds = array<i64: 1, 8, 1>}, {transform_indices = @transform_6, window_bounds = array<i64: 1, 8, 128>}]} {
    %c0_i32 = arith.constant 0 : i32
    %0 = arith.cmpi eq, %arg2, %c0_i32 : i32
    %1 = arith.extui %0 : i1 to i32
    %c0_i32_0 = arith.constant 0 : i32
    %2 = arith.cmpi ne, %1, %c0_i32_0 : i32
    scf.if %2 {
      %cst_22 = arith.constant 0.000000e+00 : f32
      %33 = vector.broadcast %cst_22 : f32 to vector<128x128xf32>
      %c0_23 = arith.constant 0 : index
      %c0_24 = arith.constant 0 : index
      %34 = vector.load %arg10[%c0_23, %c0_24] : memref<128x128xf32, #tpu.memory_space<vmem>>, vector<128x128xf32>
      tpu.vector_store %arg10[%c0_23, %c0_24], %33 {strides = array<i32>} : memref<128x128xf32, #tpu.memory_space<vmem>>, vector<128x128xf32>,
      %cst_25 = arith.constant 0.000000e+00 : f32
      %35 = vector.broadcast %cst_25 : f32 to vector<1x128xf32>
      %c0_26 = arith.constant 0 : index
      %c0_27 = arith.constant 0 : index
      %36 = vector.load %arg11[%c0_26, %c0_27] : memref<1x128xf32, #tpu.memory_space<vmem>>, vector<1x128xf32>
      tpu.vector_store %arg11[%c0_26, %c0_27], %35 {strides = array<i32>} : memref<1x128xf32, #tpu.memory_space<vmem>>, vector<1x128xf32>,
    } else {
    }
    %c0 = arith.constant 0 : index
    %c0_1 = arith.constant 0 : index
    %c0_2 = arith.constant 0 : index
    %3 = vector.load %arg5[%c0, %c0_1, %c0_2] : memref<1x8x128xf32, #tpu.memory_space<vmem>>, vector<1x8x128xf32>
    %4 = vector.shape_cast %3 : vector<1x8x128xf32> to vector<8x128xf32>
    %c0_3 = arith.constant 0 : index
    %c0_4 = arith.constant 0 : index
    %c0_5 = arith.constant 0 : index
    %5 = vector.load %arg6[%c0_3, %c0_4, %c0_5] : memref<1x8x128xf32, #tpu.memory_space<vmem>>, vector<1x8x128xf32>
    %6 = vector.shape_cast %5 : vector<1x8x128xf32> to vector<8x128xf32>
    %cst = arith.constant 0.000000e+00 : f32
    %7 = vector.broadcast %cst : f32 to vector<8x128xf32>
    %8 = arith.cmpf ogt, %4, %7 : vector<8x128xf32>
    %cst_6 = arith.constant 1.000000e+00 : f32
    %9 = vector.broadcast %cst_6 : f32 to vector<8x128xf32>
    %10 = arith.addf %4, %9 : vector<8x128xf32>
    %11 = math.exp %4 : vector<8x128xf32>
    %12 = arith.select %8, %10, %11 : vector<8x128xi1>, vector<8x128xf32>
    %c0_7 = arith.constant 0 : index
    %c0_8 = arith.constant 0 : index
    %c0_9 = arith.constant 0 : index
    %13 = vector.load %arg8[%c0_7, %c0_8, %c0_9] : memref<1x8x1xf32, #tpu.memory_space<vmem>>, vector<1x8x1xf32>
    %14 = vector.shape_cast %13 : vector<1x8x1xf32> to vector<8x1xf32>
    %15 = vector.broadcast %14 : vector<8x1xf32> to vector<8x128xf32>
    %16 = arith.mulf %12, %15 : vector<8x128xf32>
    %17 = vector.broadcast %14 : vector<8x1xf32> to vector<8x128xf32>
    %18 = arith.mulf %6, %17 : vector<8x128xf32>
    %c0_10 = arith.constant 0 : index
    %c0_11 = arith.constant 0 : index
    %19 = vector.load %arg10[%c0_10, %c0_11] : memref<128x128xf32, #tpu.memory_space<vmem>>, vector<128x128xf32>
    %20 = arith.truncf %16 : vector<8x128xf32> to vector<8x128xbf16>
    %21 = arith.truncf %18 : vector<8x128xf32> to vector<8x128xbf16>
    %cst_12 = arith.constant dense<0.000000e+00> : vector<128x128xf32>
    %22 = tpu.matmul %20, %21, %cst_12 {dimension_numbers = #tpu.dot_dimension_numbers<[0], [0], [1], [1], [0, 1, 1, 1], [], []>} : vector<8x128xbf16>, vector<8x128xbf16>, vector<128x128xf32> -> vector<128x128xf32>
    %23 = arith.addf %19, %22 : vector<128x128xf32>
    %c0_13 = arith.constant 0 : index
    %c0_14 = arith.constant 0 : index
    %24 = vector.load %arg10[%c0_13, %c0_14] : memref<128x128xf32, #tpu.memory_space<vmem>>, vector<128x128xf32>
    tpu.vector_store %arg10[%c0_13, %c0_14], %23 {strides = array<i32>} : memref<128x128xf32, #tpu.memory_space<vmem>>, vector<128x128xf32>,
    %c0_15 = arith.constant 0 : index
    %c0_16 = arith.constant 0 : index
    %25 = vector.load %arg11[%c0_15, %c0_16] : memref<1x128xf32, #tpu.memory_space<vmem>>, vector<1x128xf32>
    %cst_17 = arith.constant dense<0.000000e+00> : vector<128xf32>
    %26 = vector.multi_reduction <add>, %16, %cst_17 [0] : vector<8x128xf32> to vector<128xf32>
    %27 = vector.shape_cast %26 : vector<128xf32> to vector<1x128xf32>
    %28 = arith.addf %25, %27 : vector<1x128xf32>
    %c0_18 = arith.constant 0 : index
    %c0_19 = arith.constant 0 : index
    %29 = vector.load %arg11[%c0_18, %c0_19] : memref<1x128xf32, #tpu.memory_space<vmem>>, vector<1x128xf32>
    tpu.vector_store %arg11[%c0_18, %c0_19], %28 {strides = array<i32>} : memref<1x128xf32, #tpu.memory_space<vmem>>, vector<1x128xf32>,
    %c0_i32_20 = arith.constant 0 : i32
    %30 = arith.cmpi eq, %arg2, %c0_i32_20 : i32
    %31 = arith.extui %30 : i1 to i32
    %c0_i32_21 = arith.constant 0 : i32
    %32 = arith.cmpi ne, %31, %c0_i32_21 : i32
    scf.if %32 {
      %c0_22 = arith.constant 0 : index
      %c0_23 = arith.constant 0 : index
      %c0_24 = arith.constant 0 : index
      %33 = vector.load %arg4[%c0_22, %c0_23, %c0_24] : memref<1x8x128xf32, #tpu.memory_space<vmem>>, vector<1x8x128xf32>
      %34 = vector.shape_cast %33 : vector<1x8x128xf32> to vector<8x128xf32>
      %cst_25 = arith.constant 0.000000e+00 : f32
      %35 = vector.broadcast %cst_25 : f32 to vector<8x128xf32>
      %36 = arith.cmpf ogt, %34, %35 : vector<8x128xf32>
      %cst_26 = arith.constant 1.000000e+00 : f32
      %37 = vector.broadcast %cst_26 : f32 to vector<8x128xf32>
      %38 = arith.addf %34, %37 : vector<8x128xf32>
      %39 = math.exp %34 : vector<8x128xf32>
      %40 = arith.select %36, %38, %39 : vector<8x128xi1>, vector<8x128xf32>
      %c0_27 = arith.constant 0 : index
      %c0_28 = arith.constant 0 : index
      %c0_29 = arith.constant 0 : index
      %41 = vector.load %arg7[%c0_27, %c0_28, %c0_29] : memref<1x8x1xf32, #tpu.memory_space<vmem>>, vector<1x8x1xf32>
      %42 = vector.shape_cast %41 : vector<1x8x1xf32> to vector<8x1xf32>
      %43 = vector.broadcast %42 : vector<8x1xf32> to vector<8x128xf32>
      %44 = arith.mulf %40, %43 : vector<8x128xf32>
      %c0_30 = arith.constant 0 : index
      %c0_31 = arith.constant 0 : index
      %45 = vector.load %arg3[%c0_30, %c0_31] : memref<128x128xbf16, #tpu.memory_space<vmem>>, vector<128x128xbf16>
      %c0_32 = arith.constant 0 : index
      %c0_33 = arith.constant 0 : index
      %46 = vector.load %arg10[%c0_32, %c0_33] : memref<128x128xf32, #tpu.memory_space<vmem>>, vector<128x128xf32>
      %47 = arith.truncf %46 : vector<128x128xf32> to vector<128x128xbf16>
      %48 = arith.mulf %47, %45 : vector<128x128xbf16>
      %49 = arith.truncf %44 : vector<8x128xf32> to vector<8x128xbf16>
      %cst_34 = arith.constant dense<0.000000e+00> : vector<8x128xf32>
      %50 = tpu.matmul %49, %48, %cst_34 {dimension_numbers = #tpu.dot_dimension_numbers<[1], [0], [0], [1], [0, 0, 1, 1], [], []>} : vector<8x128xbf16>, vector<128x128xbf16>, vector<8x128xf32> -> vector<8x128xf32>
      %c0_35 = arith.constant 0 : index
      %c0_36 = arith.constant 0 : index
      %51 = vector.load %arg11[%c0_35, %c0_36] : memref<1x128xf32, #tpu.memory_space<vmem>>, vector<1x128xf32>
      %52 = vector.broadcast %51 : vector<1x128xf32> to vector<8x128xf32>
      %53 = arith.mulf %44, %52 : vector<8x128xf32>
      %54 = arith.truncf %53 : vector<8x128xf32> to vector<8x128xbf16>
      %cst_37 = arith.constant dense<0.000000e+00> : vector<8x128xf32>
      %55 = tpu.matmul %54, %45, %cst_37 {dimension_numbers = #tpu.dot_dimension_numbers<[1], [0], [0], [1], [0, 0, 1, 1], [], []>} : vector<8x128xbf16>, vector<128x128xbf16>, vector<8x128xf32> -> vector<8x128xf32>
      %cst_38 = arith.constant 9.99999997E-7 : f32
      %56 = vector.broadcast %cst_38 : f32 to vector<8x128xf32>
      %57 = arith.addf %55, %56 : vector<8x128xf32>
      %58 = arith.divf %50, %57 : vector<8x128xf32>
      %c0_39 = arith.constant 0 : index
      %c0_40 = arith.constant 0 : index
      %c0_41 = arith.constant 0 : index
      %59 = vector.load %arg9[%c0_39, %c0_40, %c0_41] : memref<1x8x128xf32, #tpu.memory_space<vmem>>, vector<1x8x128xf32>
      %60 = vector.shape_cast %59 : vector<1x8x128xf32> to vector<8x128xf32>
      %61 = vector.shape_cast %58 : vector<8x128xf32> to vector<1x8x128xf32>
      tpu.vector_store %arg9[%c0_39, %c0_40, %c0_41], %61 {strides = array<i32>} : memref<1x8x128xf32, #tpu.memory_space<vmem>>, vector<1x8x128xf32>,
    } else {
    }
    return
  }
  func.func @transform_0(%arg0: i32, %arg1: i32, %arg2: i32) -> (i32, i32) {
    %c0_i32 = arith.constant 0 : i32
    %c0_i32_0 = arith.constant 0 : i32
    %c0_i32_1 = arith.constant 0 : i32
    return %c0_i32, %c0_i32_0 : i32, i32
  }
  func.func @transform_1(%arg0: i32, %arg1: i32, %arg2: i32) -> (i32, i32, i32) {
    %c0_i32 = arith.constant 0 : i32
    %c0_i32_0 = arith.constant 0 : i32
    return %arg0, %arg1, %c0_i32 : i32, i32, i32
  }
  func.func @transform_2(%arg0: i32, %arg1: i32, %arg2: i32) -> (i32, i32, i32) {
    %c0_i32 = arith.constant 0 : i32
    %c0_i32_0 = arith.constant 0 : i32
    return %arg0, %arg2, %c0_i32 : i32, i32, i32
  }
  func.func @transform_3(%arg0: i32, %arg1: i32, %arg2: i32) -> (i32, i32, i32) {
    %c0_i32 = arith.constant 0 : i32
    %c0_i32_0 = arith.constant 0 : i32
    return %arg0, %arg2, %c0_i32 : i32, i32, i32
  }
  func.func @transform_4(%arg0: i32, %arg1: i32, %arg2: i32) -> (i32, i32, i32) {
    %c0_i32 = arith.constant 0 : i32
    %c0_i32_0 = arith.constant 0 : i32
    return %arg0, %arg1, %c0_i32 : i32, i32, i32
  }
  func.func @transform_5(%arg0: i32, %arg1: i32, %arg2: i32) -> (i32, i32, i32) {
    %c0_i32 = arith.constant 0 : i32
    %c0_i32_0 = arith.constant 0 : i32
    return %arg0, %arg2, %c0_i32 : i32, i32, i32
  }
  func.func @transform_6(%arg0: i32, %arg1: i32, %arg2: i32) -> (i32, i32, i32) {
    %c0_i32 = arith.constant 0 : i32
    %c0_i32_0 = arith.constant 0 : i32
    return %arg0, %arg1, %c0_i32 : i32, i32, i32
  }
}

</mosaic_0001>

<llo_original>
// kernel: tpu_custom_call.1
$region0: #{tpu_custom_call.1}
  #allocation0 [shape = 'u32[]', space=smem, size = 0x4, offset = 0x4, fixed_abs, tag = 'smem constant byte address 0x4 - core index']
  #allocation1 [shape = 'u32[144,128]{1,0:T(1,128)}', space=vmem, size = 0x12000, scoped, tag = 'internal scratch']
  #allocation2 [shape = 'f32[128,128]{1,0:T(8,128)}', space=vmem, size = 0x10000, scoped, tag = 'scratch operand']
  #allocation3 [shape = 'f32[1,128]{1,0:T(1,128)}', space=vmem, size = 0x200, scoped, tag = 'scratch operand']
  %s0 = inlined_call_operand.hbm [shape: bf16[128,128], index: 0, kind: input, shape index: {}]
  %s1 = inlined_call_operand.vmem [shape: f32[2,8,128], index: 1, kind: input, shape index: {}]
  %s2 = inlined_call_operand.vmem [shape: f32[2,8,128], index: 2, kind: input, shape index: {}]
  %s3 = inlined_call_operand.hbm [shape: f32[2,8,128], index: 3, kind: input, shape index: {}]
  %s4 = inlined_call_operand.vmem [shape: f32[2,8,1], index: 4, kind: input, shape index: {}]
  %s5 = inlined_call_operand.vmem [shape: f32[2,8,1], index: 5, kind: input, shape index: {}]
  %s6 = inlined_call_operand.hbm [shape: f32[2,8,128], index: 6, kind: output, shape index: {}]
  %s7 = sld [smem:[#allocation0]]
  $region73: #{tpu_custom_call.1} parent=0
    _
  %s9 = ssub.s32 1, %s7
  %s10 = scalar_select 0, %s9, %s7
  $region1: #{tpu_custom_call.1} parent=0
    #allocation4 [shape = 'u8[32768]{0}', space=vmem, size = 0x8000, scoped, tag = 'input window, operand 0, single buffered']
    #allocation5 [shape = 's32[2]{0}', space=sflag, size = 0x8, scoped, tag = 'scoped memory for tpu_custom_call.1']
    #allocation6 [shape = 's32[2]{0}', space=sflag, size = 0x8, scoped, tag = 'scoped memory for tpu_custom_call.1']
    #allocation7 [shape = 'u8[8192]{0}', space=vmem, size = 0x2000, scoped, tag = 'input window, operand 3']
    #allocation8 [shape = 's32[2]{0}', space=sflag, size = 0x8, scoped, tag = 'scoped memory for tpu_custom_call.1']
    #allocation9 [shape = 'u8[8192]{0}', space=vmem, size = 0x2000, scoped, tag = 'output window, operand 0']
    %11 = vsyncpa [#allocation5], 0
    %12 = vsyncpa [#allocation8], 0
    %s13 = scalar_lea.sflag [#allocation8], 1
    %14 = vsyncpa %s13, 0
    %15 = vsyncpa [#allocation6], 0
    %s16 = scalar_lea.sflag [#allocation6], 1
    %17 = vsyncpa %s16, 0
    loop: start=0, step=1, limit=4
    $region2: #{tpu_custom_call.1} parent=1 // loop_pre_header
      _
    $region3: #{tpu_custom_call.1} parent=1 // loop_header
      %s19 = sphi 0, %s23
      %p20 = scmp.ge.s32.totalorder %s19, 4
      %s26 = sphi 0, %s45
      %s27 = sphi 0, %s41
      %s28 = sphi 0, %s37
      %s29 = sphi 0, %s26
      %s30 = sphi 0, %s27
      %s31 = sphi 0, %s28
      %s32 = sphi 0, %s29
      %s33 = sphi 0, %s30
      %s34 = sphi 0, %s31
      %s46 = sphi 0, %s46
      %s48 = sphi 0, %s46
      %s49 = sphi 0, %s48
      %s63 = sphi 0, %s49
      %s71 = sphi 0, %s73
      %s74 = sphi 0, %s71
      %s75 = sphi 0, %s74
      %s91 = sphi 0, %s75
      %s99 = sphi 0, %s101
      %s102 = sphi 0, %s99
      %s103 = sphi 0, %s102
      %s119 = sphi 0, %s103
      %s127 = sphi 0, %s129
      %s130 = sphi 0, %s127
      %s131 = sphi 0, %s130
      %s147 = sphi 0, %s131
      %s155 = sphi 0, %s157
      %s158 = sphi 0, %s155
      %s159 = sphi 0, %s158
      %s175 = sphi 0, %s159
      %s183 = sphi 0, %s185
      %s186 = sphi 0, %s183
      %s187 = sphi 0, %s186
      %s203 = sphi 0, %s187
      %s211 = sphi 0, %s213
      %s214 = sphi 0, %s211
      %s215 = sphi 0, %s214
      %s231 = sphi 0, %s215
    $region4: #{tpu_custom_call.1} parent=1 // loop_header_branch
      %22 = sbr.rel (%p20) target = $region8
    $region5: #{tpu_custom_call.1} parent=1 // loop_body
      %s24 = ssub.s32 %s19, 1
      %s25 = ssub.s32 %s19, 2
      %s35 = sadd.s32 1, %s28
      %p36 = scmp.ge.s32.totalorder %s35, 1
      %s37 = scalar_select %p36, 0, %s35
      %s38 = sadd.s32 1, %s27
      %s39 = scalar_select %p36, %s38, %s27
      %p40 = scmp.ge.s32.totalorder %s39, 1
      %s41 = scalar_select %p40, 0, %s39
      %s42 = sadd.s32 1, %s26
      %s43 = scalar_select %p40, %s42, %s26
      %p44 = scmp.ge.s32.totalorder %s43, 2
      %s45 = scalar_select %p44, 0, %s43
      %s47 = sadd.s32 %s46, 1
      %p50 = scmp.eq.s32.totalorder %s19, 1
      %p51 = scmp.ne.s32.totalorder %s46, %s48
      %p52 = scmp.eq.s32.totalorder %s19, 0
      %p53 = por %p51, %p52
      %p54 = scmp.ne.s32.totalorder %s46, %s48
      %p55 = scmp.eq.s32.totalorder %s24, 1
      %p56 = por %p54, %p55
      %p57 = scmp.ne.s32.totalorder %s48, %s49
      %p58 = scmp.eq.s32.totalorder %s24, 0
      %p59 = por %p57, %p58
      %p60 = scmp.ne.s32.totalorder %s48, %s49
      %p61 = scmp.eq.s32.totalorder %s25, 1
      %p62 = por %p60, %p61
      %p64 = scmp.ne.s32.totalorder %s49, %s63
      %p65 = scmp.eq.s32.totalorder %s25, 0
      %p66 = por %p64, %p65
      %s67 = ssub.s32 %s26, %s45
      %s68 = ssub.s32 %s27, %s41
      %s69 = sor.u32 %s67, %s68
      %p70 = scmp.eq.s32.totalorder %s69, 0
      %s72 = sadd.s32 %s71, 1
      %s73 = scalar_select %p70, %s71, %s72
      %p76 = pneg %p70
      %p77 = scmp.eq.s32.totalorder %s19, 1
      %p78 = por %p76, %p77
      %p79 = scmp.ne.s32.totalorder %s71, %s74
      %p80 = scmp.eq.s32.totalorder %s19, 0
      %p81 = por %p79, %p80
      %p82 = scmp.ne.s32.totalorder %s71, %s74
      %p83 = scmp.eq.s32.totalorder %s24, 1
      %p84 = por %p82, %p83
      %p85 = scmp.ne.s32.totalorder %s74, %s75
      %p86 = scmp.eq.s32.totalorder %s24, 0
      %p87 = por %p85, %p86
      %p88 = scmp.ne.s32.totalorder %s74, %s75
      %p89 = scmp.eq.s32.totalorder %s25, 1
      %p90 = por %p88, %p89
      %p92 = scmp.ne.s32.totalorder %s75, %s91
      %p93 = scmp.eq.s32.totalorder %s25, 0
      %p94 = por %p92, %p93
      %s95 = ssub.s32 %s26, %s45
      %s96 = ssub.s32 %s28, %s37
      %s97 = sor.u32 %s95, %s96
      %p98 = scmp.eq.s32.totalorder %s97, 0
      %s100 = sadd.s32 %s99, 1
      %s101 = scalar_select %p98, %s99, %s100
      %p104 = pneg %p98
      %p105 = scmp.eq.s32.totalorder %s19, 1
      %p106 = por %p104, %p105
      %p107 = scmp.ne.s32.totalorder %s99, %s102
      %p108 = scmp.eq.s32.totalorder %s19, 0
      %p109 = por %p107, %p108
      %p110 = scmp.ne.s32.totalorder %s99, %s102
      %p111 = scmp.eq.s32.totalorder %s24, 1
      %p112 = por %p110, %p111
      %p113 = scmp.ne.s32.totalorder %s102, %s103
      %p114 = scmp.eq.s32.totalorder %s24, 0
      %p115 = por %p113, %p114
      %p116 = scmp.ne.s32.totalorder %s102, %s103
      %p117 = scmp.eq.s32.totalorder %s25, 1
      %p118 = por %p116, %p117
      %p120 = scmp.ne.s32.totalorder %s103, %s119
      %p121 = scmp.eq.s32.totalorder %s25, 0
      %p122 = por %p120, %p121
      %s123 = ssub.s32 %s26, %s45
      %s124 = ssub.s32 %s28, %s37
      %s125 = sor.u32 %s123, %s124
      %p126 = scmp.eq.s32.totalorder %s125, 0
      %s128 = sadd.s32 %s127, 1
      %s129 = scalar_select %p126, %s127, %s128
      %p132 = pneg %p126
      %p133 = scmp.eq.s32.totalorder %s19, 1
      %p134 = por %p132, %p133
      %p135 = scmp.ne.s32.totalorder %s127, %s130
      %p136 = scmp.eq.s32.totalorder %s19, 0
      %p137 = por %p135, %p136
      %p138 = scmp.ne.s32.totalorder %s127, %s130
      %p139 = scmp.eq.s32.totalorder %s24, 1
      %p140 = por %p138, %p139
      %p141 = scmp.ne.s32.totalorder %s130, %s131
      %p142 = scmp.eq.s32.totalorder %s24, 0
      %p143 = por %p141, %p142
      %p144 = scmp.ne.s32.totalorder %s130, %s131
      %p145 = scmp.eq.s32.totalorder %s25, 1
      %p146 = por %p144, %p145
      %p148 = scmp.ne.s32.totalorder %s131, %s147
      %p149 = scmp.eq.s32.totalorder %s25, 0
      %p150 = por %p148, %p149
      %s151 = ssub.s32 %s26, %s45
      %s152 = ssub.s32 %s27, %s41
      %s153 = sor.u32 %s151, %s152
      %p154 = scmp.eq.s32.totalorder %s153, 0
      %s156 = sadd.s32 %s155, 1
      %s157 = scalar_select %p154, %s155, %s156
      %p160 = pneg %p154
      %p161 = scmp.eq.s32.totalorder %s19, 1
      %p162 = por %p160, %p161
      %p163 = scmp.ne.s32.totalorder %s155, %s158
      %p164 = scmp.eq.s32.totalorder %s19, 0
      %p165 = por %p163, %p164
      %p166 = scmp.ne.s32.totalorder %s155, %s158
      %p167 = scmp.eq.s32.totalorder %s24, 1
      %p168 = por %p166, %p167
      %p169 = scmp.ne.s32.totalorder %s158, %s159
      %p170 = scmp.eq.s32.totalorder %s24, 0
      %p171 = por %p169, %p170
      %p172 = scmp.ne.s32.totalorder %s158, %s159
      %p173 = scmp.eq.s32.totalorder %s25, 1
      %p174 = por %p172, %p173
      %p176 = scmp.ne.s32.totalorder %s159, %s175
      %p177 = scmp.eq.s32.totalorder %s25, 0
      %p178 = por %p176, %p177
      %s179 = ssub.s32 %s26, %s45
      %s180 = ssub.s32 %s28, %s37
      %s181 = sor.u32 %s179, %s180
      %p182 = scmp.eq.s32.totalorder %s181, 0
      %s184 = sadd.s32 %s183, 1
      %s185 = scalar_select %p182, %s183, %s184
      %p188 = pneg %p182
      %p189 = scmp.eq.s32.totalorder %s19, 1
      %p190 = por %p188, %p189
      %p191 = scmp.ne.s32.totalorder %s183, %s186
      %p192 = scmp.eq.s32.totalorder %s19, 0
      %p193 = por %p191, %p192
      %p194 = scmp.ne.s32.totalorder %s183, %s186
      %p195 = scmp.eq.s32.totalorder %s24, 1
      %p196 = por %p194, %p195
      %p197 = scmp.ne.s32.totalorder %s186, %s187
      %p198 = scmp.eq.s32.totalorder %s24, 0
      %p199 = por %p197, %p198
      %p200 = scmp.ne.s32.totalorder %s186, %s187
      %p201 = scmp.eq.s32.totalorder %s25, 1
      %p202 = por %p200, %p201
      %p204 = scmp.ne.s32.totalorder %s187, %s203
      %p205 = scmp.eq.s32.totalorder %s25, 0
      %p206 = por %p204, %p205
      %s207 = ssub.s32 %s26, %s45
      %s208 = ssub.s32 %s27, %s41
      %s209 = sor.u32 %s207, %s208
      %p210 = scmp.eq.s32.totalorder %s209, 0
      %s212 = sadd.s32 %s211, 1
      %s213 = scalar_select %p210, %s211, %s212
      %p216 = pneg %p210
      %p217 = scmp.eq.s32.totalorder %s19, 1
      %p218 = por %p216, %p217
      %p219 = scmp.ne.s32.totalorder %s211, %s214
      %p220 = scmp.eq.s32.totalorder %s19, 0
      %p221 = por %p219, %p220
      %p222 = scmp.ne.s32.totalorder %s211, %s214
      %p223 = scmp.eq.s32.totalorder %s24, 1
      %p224 = por %p222, %p223
      %p225 = scmp.ne.s32.totalorder %s214, %s215
      %p226 = scmp.eq.s32.totalorder %s24, 0
      %p227 = por %p225, %p226
      %p228 = scmp.ne.s32.totalorder %s214, %s215
      %p229 = scmp.eq.s32.totalorder %s25, 1
      %p230 = por %p228, %p229
      %p232 = scmp.ne.s32.totalorder %s215, %s231
      %p233 = scmp.eq.s32.totalorder %s25, 0
      %p234 = por %p232, %p233
      %p235 = scmp.le.s32.totalorder 1, %s19
      %p236 = scmp.lt.s32.totalorder %s19, 3
      %p237 = pnand %p235, %p236
      %p238 = pneg %p237
      // Predicated region
      $region9: #{tpu_custom_call.1} parent=5 // pred_check
        _
      $region10: #{tpu_custom_call.1} parent=5 // pred_check_branch
        %240 = sbr.rel (%p237) target = $region12
      $region11: #{tpu_custom_call.1} parent=5 // pred_region
        %s241 = ssub.s32 %s19, 1
        // Predicated region
        $region13: #{tpu_custom_call.1} parent=11 // pred_check
          %p242 = pneg %p59
        $region14: #{tpu_custom_call.1} parent=11 // pred_check_branch
          %244 = sbr.rel (%p242) target = $region16
        $region15: #{tpu_custom_call.1} parent=11 // pred_region
          %s246 = ssub.s32 1024, 1024
          %247 = vsyncadd [#allocation5], %s246
          %s248 = sshll.u32 [#allocation4], 4
          %s249 = int_to_ptr.vmem [resolvable:$true] %s248
          %254 = dma.hbm_to_vmem [thread:$0]  %s0, 1024, %s249, [#allocation5], 64, 64, 4
        $region16: #{tpu_custom_call.1} parent=11 // pred_fallthru
          _
      $region12: #{tpu_custom_call.1} parent=5 // pred_fallthru
        _
      %p255 = scmp.lt.s32.totalorder %s19, 2
      // Predicated region
      $region17: #{tpu_custom_call.1} parent=5 // pred_check
        %p256 = pneg %p255
      $region18: #{tpu_custom_call.1} parent=5 // pred_check_branch
        %258 = sbr.rel (%p256) target = $region20
      $region19: #{tpu_custom_call.1} parent=5 // pred_region
        // Predicated region
        $region21: #{tpu_custom_call.1} parent=19 // pred_check
          %p259 = pneg %p81
        $region22: #{tpu_custom_call.1} parent=19 // pred_check_branch
          %261 = sbr.rel (%p259) target = $region24
        $region23: #{tpu_custom_call.1} parent=19 // pred_region
          %p262 = scmp.lt.s32.totalorder %s26, 1
          %s263 = scalar_select %p262, %s26, 1
          %p264 = scmp.lt.s32.totalorder %s27, 0
          %s265 = scalar_select %p264, %s27, 0
          %s266 = sadd.s32 %s265, %s263
          %s267 = smul.addr %s266, 8
          %s268 = scalar_lea.vmem %s1, %s267
        $region24: #{tpu_custom_call.1} parent=19 // pred_fallthru
          _
        // Predicated region
        $region25: #{tpu_custom_call.1} parent=19 // pred_check
          %p269 = pneg %p109
        $region26: #{tpu_custom_call.1} parent=19 // pred_check_branch
          %271 = sbr.rel (%p269) target = $region28
        $region27: #{tpu_custom_call.1} parent=19 // pred_region
          %p272 = scmp.lt.s32.totalorder %s26, 1
          %s273 = scalar_select %p272, %s26, 1
          %p274 = scmp.lt.s32.totalorder %s28, 0
          %s275 = scalar_select %p274, %s28, 0
          %s276 = sadd.s32 %s275, %s273
          %s277 = smul.addr %s276, 8
          %s278 = scalar_lea.vmem %s2, %s277
        $region28: #{tpu_custom_call.1} parent=19 // pred_fallthru
          _
        // Predicated region
        $region29: #{tpu_custom_call.1} parent=19 // pred_check
          %p279 = pneg %p137
        $region30: #{tpu_custom_call.1} parent=19 // pred_check_branch
          %281 = sbr.rel (%p279) target = $region32
        $region31: #{tpu_custom_call.1} parent=19 // pred_region
          %s282 = sand.u32 %s127, 1
          %s283 = scalar_lea.sflag [#allocation8], %s282
          %s284 = sand.u32 %s127, 1
          %s285 = smul.addr %s284, 8
          %s286 = scalar_lea.vmem [#allocation7], %s285
          %s288 = ssub.s32 128, 128
          %289 = vsyncadd %s283, %s288
          %s290 = sadd.s32 %s28, %s26
          %s291 = smul.addr %s290, 128
          %s292 = scalar_lea.hbm %s3, %s291
          %s294 = sshll.u32 %s286, 4
          %s295 = int_to_ptr.vmem [resolvable:$true] %s294
          %297 = dma.hbm_to_vmem [thread:$0]  %s292, 128, %s295, %s283
        $region32: #{tpu_custom_call.1} parent=19 // pred_fallthru
          _
        // Predicated region
        $region33: #{tpu_custom_call.1} parent=19 // pred_check
          %p298 = pneg %p165
        $region34: #{tpu_custom_call.1} parent=19 // pred_check_branch
          %300 = sbr.rel (%p298) target = $region36
        $region35: #{tpu_custom_call.1} parent=19 // pred_region
          %p301 = scmp.lt.s32.totalorder %s26, 1
          %s302 = scalar_select %p301, %s26, 1
          %p303 = scmp.lt.s32.totalorder %s27, 0
          %s304 = scalar_select %p303, %s27, 0
          %s305 = sadd.s32 %s304, %s302
          %s306 = smul.addr %s305, 8
          %s307 = scalar_lea.vmem %s4, %s306
        $region36: #{tpu_custom_call.1} parent=19 // pred_fallthru
          _
        // Predicated region
        $region37: #{tpu_custom_call.1} parent=19 // pred_check
          %p308 = pneg %p193
        $region38: #{tpu_custom_call.1} parent=19 // pred_check_branch
          %310 = sbr.rel (%p308) target = $region40
        $region39: #{tpu_custom_call.1} parent=19 // pred_region
          %p311 = scmp.lt.s32.totalorder %s26, 1
          %s312 = scalar_select %p311, %s26, 1
          %p313 = scmp.lt.s32.totalorder %s28, 0
          %s314 = scalar_select %p313, %s28, 0
          %s315 = sadd.s32 %s314, %s312
          %s316 = smul.addr %s315, 8
          %s317 = scalar_lea.vmem %s5, %s316
        $region40: #{tpu_custom_call.1} parent=19 // pred_fallthru
          _
      $region20: #{tpu_custom_call.1} parent=5 // pred_fallthru
        _
      %p318 = scmp.le.s32.totalorder 1, %s19
      %p319 = scmp.lt.s32.totalorder %s19, 3
      %p320 = pnand %p318, %p319
      %p321 = pneg %p320
      // Predicated region
      $region41: #{tpu_custom_call.1} parent=5 // pred_check
        _
      $region42: #{tpu_custom_call.1} parent=5 // pred_check_branch
        %323 = sbr.rel (%p320) target = $region44
      $region43: #{tpu_custom_call.1} parent=5 // pred_region
        %s324 = ssub.s32 %s19, 1
        // Predicated region
        $region45: #{tpu_custom_call.1} parent=43 // pred_check
          %p325 = pneg %p59
        $region46: #{tpu_custom_call.1} parent=43 // pred_check_branch
          %327 = sbr.rel (%p325) target = $region48
        $region47: #{tpu_custom_call.1} parent=43 // pred_region
          %328 = dma.done [#allocation5], 1024
        $region48: #{tpu_custom_call.1} parent=43 // pred_fallthru
          _
        %s329 = sand.u32 %s130, 1
        %s330 = scalar_lea.sflag [#allocation8], %s329
        %s331 = sand.u32 %s130, 1
        %s332 = smul.addr %s331, 8
        %s333 = scalar_lea.vmem [#allocation7], %s332
        // Predicated region
        $region49: #{tpu_custom_call.1} parent=43 // pred_check
          %p334 = pneg %p143
        $region50: #{tpu_custom_call.1} parent=43 // pred_check_branch
          %336 = sbr.rel (%p334) target = $region52
        $region51: #{tpu_custom_call.1} parent=43 // pred_region
          %337 = dma.done %s330, 128
        $region52: #{tpu_custom_call.1} parent=43 // pred_fallthru
          _
        %p338 = pneg %p59
        %p339 = pneg %p56
        %p340 = scmp.lt.s32.totalorder %s29, 1
        %s341 = scalar_select %p340, %s29, 1
        %p342 = scmp.lt.s32.totalorder %s30, 0
        %s343 = scalar_select %p342, %s30, 0
        %s344 = sadd.s32 %s343, %s341
        %s345 = smul.addr %s344, 8
        %s346 = scalar_lea.vmem %s1, %s345
        %p347 = pneg %p87
        %p348 = pneg %p84
        %p349 = scmp.lt.s32.totalorder %s29, 1
        %s350 = scalar_select %p349, %s29, 1
        %p351 = scmp.lt.s32.totalorder %s31, 0
        %s352 = scalar_select %p351, %s31, 0
        %s353 = sadd.s32 %s352, %s350
        %s354 = smul.addr %s353, 8
        %s355 = scalar_lea.vmem %s2, %s354
        %p356 = pneg %p115
        %p357 = pneg %p112
        %s358 = sand.u32 %s130, 1
        %s359 = scalar_lea.sflag [#allocation8], %s358
        %s360 = sand.u32 %s130, 1
        %s361 = smul.addr %s360, 8
        %s362 = scalar_lea.vmem [#allocation7], %s361
        %p363 = pneg %p143
        %p364 = pneg %p140
        %p365 = scmp.lt.s32.totalorder %s29, 1
        %s366 = scalar_select %p365, %s29, 1
        %p367 = scmp.lt.s32.totalorder %s30, 0
        %s368 = scalar_select %p367, %s30, 0
        %s369 = sadd.s32 %s368, %s366
        %s370 = smul.addr %s369, 8
        %s371 = scalar_lea.vmem %s4, %s370
        %p372 = pneg %p171
        %p373 = pneg %p168
        %p374 = scmp.lt.s32.totalorder %s29, 1
        %s375 = scalar_select %p374, %s29, 1
        %p376 = scmp.lt.s32.totalorder %s31, 0
        %s377 = scalar_select %p376, %s31, 0
        %s378 = sadd.s32 %s377, %s375
        %s379 = smul.addr %s378, 8
        %s380 = scalar_lea.vmem %s5, %s379
        %p381 = pneg %p199
        %p382 = pneg %p196
        %p383 = pneg %p227
        %p384 = pneg %p224
        %s385 = sand.u32 %s214, 1
        %s386 = scalar_lea.sflag [#allocation6], %s385
        %s387 = sand.u32 %s214, 1
        %s388 = smul.addr %s387, 8
        %s389 = scalar_lea.vmem [#allocation9], %s388
        %p390 = scmp.lt.s32.totalorder %s29, 1
        %s391 = scalar_select %p390, %s29, 1
        %p392 = scmp.lt.s32.totalorder %s30, 0
        %s393 = scalar_select %p392, %s30, 0
        %s394 = sadd.s32 %s393, %s391
        %s395 = smul.addr %s394, 8
        %s396 = scalar_lea.vmem %s1, %s395
        %p397 = scmp.lt.s32.totalorder %s29, 1
        %s398 = scalar_select %p397, %s29, 1
        %p399 = scmp.lt.s32.totalorder %s31, 0
        %s400 = scalar_select %p399, %s31, 0
        %s401 = sadd.s32 %s400, %s398
        %s402 = smul.addr %s401, 8
        %s403 = scalar_lea.vmem %s2, %s402
        %p404 = scmp.lt.s32.totalorder %s29, 1
        %s405 = scalar_select %p404, %s29, 1
        %p406 = scmp.lt.s32.totalorder %s30, 0
        %s407 = scalar_select %p406, %s30, 0
        %s408 = sadd.s32 %s407, %s405
        %s409 = smul.addr %s408, 8
        %s410 = scalar_lea.vmem %s4, %s409
        %p411 = scmp.lt.s32.totalorder %s29, 1
        %s412 = scalar_select %p411, %s29, 1
        %p413 = scmp.lt.s32.totalorder %s31, 0
        %s414 = scalar_select %p413, %s31, 0
        %s415 = sadd.s32 %s414, %s412
        %s416 = smul.addr %s415, 8
        %s417 = scalar_lea.vmem %s5, %s416
        %p419 = scmp.eq.s32.totalorder %s31, 0
        // Predicated region
        $region53: #{tpu_custom_call.1} parent=43 // pred_check
          %p420 = pneg %p419
        $region54: #{tpu_custom_call.1} parent=43 // pred_check_branch
          %422 = sbr.rel (%p420) target = $region56
        $region55: #{tpu_custom_call.1} parent=43 // pred_region
          %423 = vst [vmem:[#allocation2] sm:$0xff] 0.0
          %424 = vst [vmem:[#allocation2 + $0x8] sm:$0xff] 0.0
          %425 = vst [vmem:[#allocation2 + $0x10] sm:$0xff] 0.0
          %426 = vst [vmem:[#allocation2 + $0x18] sm:$0xff] 0.0
          %427 = vst [vmem:[#allocation2 + $0x20] sm:$0xff] 0.0
          %428 = vst [vmem:[#allocation2 + $0x28] sm:$0xff] 0.0
          %429 = vst [vmem:[#allocation2 + $0x30] sm:$0xff] 0.0
          %430 = vst [vmem:[#allocation2 + $0x38] sm:$0xff] 0.0
          %431 = vst [vmem:[#allocation2 + $0x40] sm:$0xff] 0.0
          %432 = vst [vmem:[#allocation2 + $0x48] sm:$0xff] 0.0
          %433 = vst [vmem:[#allocation2 + $0x50] sm:$0xff] 0.0
          %434 = vst [vmem:[#allocation2 + $0x58] sm:$0xff] 0.0
          %435 = vst [vmem:[#allocation2 + $0x60] sm:$0xff] 0.0
          %436 = vst [vmem:[#allocation2 + $0x68] sm:$0xff] 0.0
          %437 = vst [vmem:[#allocation2 + $0x70] sm:$0xff] 0.0
          %438 = vst [vmem:[#allocation2 + $0x78] sm:$0xff] 0.0
          %439 = vst [vmem:[#allocation3] sm:$0x1] 0.0
        $region56: #{tpu_custom_call.1} parent=43 // pred_fallthru
          _
        %v440 = vld [vmem:[%s403] sm:$0xff]
        %v441 = vld [vmem:[%s333] sm:$0xff]
        %vm442 = vcmp.gt.f32.partialorder %v440, 0.0
        %v443 = vadd.f32 %v440, 1.0
        %v444 = vmul.f32 %v440, 1.442695
        %v445 = vpow.pop %v444
        %v446 = vsel %vm442, %v443, %v445
        %v447 = vld [vmem:[%s417] sm:$0xff]
        %449 = vset.pattern.permute.xlu0 0
        %450 = vperm.xlu0 %449, %v447
        %v451 = vpop.permute.xlu0 %450
        %v453 = vmul.f32 %v446, %v451
        %v454 = vmul.f32 %v441, %v451
        %v455 = vld [vmem:[#allocation2] sm:$0xff]
        %v456 = vld [vmem:[#allocation2 + $0x8] sm:$0xff]
        %v457 = vld [vmem:[#allocation2 + $0x10] sm:$0xff]
        %v458 = vld [vmem:[#allocation2 + $0x18] sm:$0xff]
        %v459 = vld [vmem:[#allocation2 + $0x20] sm:$0xff]
        %v460 = vld [vmem:[#allocation2 + $0x28] sm:$0xff]
        %v461 = vld [vmem:[#allocation2 + $0x30] sm:$0xff]
        %v462 = vld [vmem:[#allocation2 + $0x38] sm:$0xff]
        %v463 = vld [vmem:[#allocation2 + $0x40] sm:$0xff]
        %v464 = vld [vmem:[#allocation2 + $0x48] sm:$0xff]
        %v465 = vld [vmem:[#allocation2 + $0x50] sm:$0xff]
        %v466 = vld [vmem:[#allocation2 + $0x58] sm:$0xff]
        %v467 = vld [vmem:[#allocation2 + $0x60] sm:$0xff]
        %v468 = vld [vmem:[#allocation2 + $0x68] sm:$0xff]
        %v469 = vld [vmem:[#allocation2 + $0x70] sm:$0xff]
        %v470 = vld [vmem:[#allocation2 + $0x78] sm:$0xff]
        %v471 = vpack.c.bf16 %v453, %v453
        %v472 = vpack.c.bf16 %v454, %v454
        %473 = vxpose.xlu0.c.b16.start [1/8] %v471, 128
        %474 = vxpose.xlu0.c.b16.cont [2/8] 0, 128
        %475 = vxpose.xlu0.c.b16.cont [3/8] 0, 128
        %476 = vxpose.xlu0.c.b16.cont [4/8] 0, 128
        %477 = vxpose.xlu0.c.b16.cont [5/8] 0, 128
        %478 = vxpose.xlu0.c.b16.cont [6/8] 0, 128
        %479 = vxpose.xlu0.c.b16.cont [7/8] 0, 128
        %480 = vxpose.xlu0.c.b16.end [8/8] 0, 128
        %v481 = vpop.trf.xlu0
        %v482 = vpop.trf.xlu0
        %v483 = vpop.trf.xlu0
        %v484 = vpop.trf.xlu0
        %v485 = vpop.trf.xlu0
        %v486 = vpop.trf.xlu0
        %v487 = vpop.trf.xlu0
        %v488 = vpop.trf.xlu0
        %vm489 = vcmask 64512
        %v491 = vsel %vm489, %v481, 0
        %v494 = vsel %vm489, %v482, 0
        %v497 = vsel %vm489, %v483, 0
        %v500 = vsel %vm489, %v484, 0
        %v503 = vsel %vm489, %v485, 0
        %v506 = vsel %vm489, %v486, 0
        %v509 = vsel %vm489, %v487, 0
        %v512 = vsel %vm489, %v488, 0
        %vm514 = vcmask 1043456
        %v516 = vsel %vm514, %v472, 0
        %518 = vmatprep.subr.bf16.mxu0 0
        %519 = vmatpush1.bf16.msra.mxu0 %v516
        %520 = vmatprep.subr.bf16.mxu0 0
        %521 = vmatpush1.bf16.msra.mxu0 0
        %522 = vmatprep.subr.bf16.mxu0 0
        %523 = vmatpush1.bf16.msra.mxu0 0
        %524 = vmatprep.subr.bf16.mxu0 0
        %525 = vmatpush1.bf16.msra.mxu0 0
        %526 = vmatprep.subr.bf16.mxu0 0
        %527 = vmatpush1.bf16.msra.mxu0 0
        %528 = vmatprep.subr.bf16.mxu0 0
        %529 = vmatpush1.bf16.msra.mxu0 0
        %530 = vmatprep.subr.bf16.mxu0 0
        %531 = vmatpush1.bf16.msra.mxu0 0
        %532 = vmatprep.subr.bf16.mxu0 0
        %533 = vmatpush1.bf16.msra.mxu0 0
        %534 = vmatprep.subr.bf16.mxu0 0
        %535 = vmatpush1.bf16.msra.mxu0 0
        %536 = vmatprep.subr.bf16.mxu0 0
        %537 = vmatpush1.bf16.msra.mxu0 0
        %538 = vmatprep.subr.bf16.mxu0 0
        %539 = vmatpush1.bf16.msra.mxu0 0
        %540 = vmatprep.subr.bf16.mxu0 0
        %541 = vmatpush1.bf16.msra.mxu0 0
        %542 = vmatprep.subr.bf16.mxu0 0
        %543 = vmatpush1.bf16.msra.mxu0 0
        %544 = vmatprep.subr.bf16.mxu0 0
        %545 = vmatpush1.bf16.msra.mxu0 0
        %546 = vmatprep.subr.bf16.mxu0 0
        %547 = vmatpush1.bf16.msra.mxu0 0
        %548 = vmatprep.subr.bf16.mxu0 0
        %549 = vmatpush1.bf16.msra.mxu0 0
        %550 = vmatprep.mubr.bf16.mxu0 0
        %551 = vmatmul.mubr.bf16.gmra.mrb[0].mxu0 %v491
        %v552 = vpop.f32.mrb[0].mxu0
        %v553 = vadd.f32 0.0, %v552
        %v554 = vpop.f32.mrb[0].mxu0
        %v555 = vpop.f32.mrb[0].mxu0
        %v556 = vadd.f32 0.0, %v555
        %v557 = vpop.f32.mrb[0].mxu0
        %558 = vmatprep.mubr.bf16.mxu0 0
        %559 = vmatmul.mubr.bf16.gmra.mrb[0].mxu0 %v494
        %v560 = vpop.f32.mrb[0].mxu0
        %v561 = vadd.f32 0.0, %v560
        %v562 = vpop.f32.mrb[0].mxu0
        %v563 = vpop.f32.mrb[0].mxu0
        %v564 = vadd.f32 0.0, %v563
        %v565 = vpop.f32.mrb[0].mxu0
        %566 = vmatprep.mubr.bf16.mxu0 0
        %567 = vmatmul.mubr.bf16.gmra.mrb[0].mxu0 %v497
        %v568 = vpop.f32.mrb[0].mxu0
        %v569 = vadd.f32 0.0, %v568
        %v570 = vpop.f32.mrb[0].mxu0
        %v571 = vpop.f32.mrb[0].mxu0
        %v572 = vadd.f32 0.0, %v571
        %v573 = vpop.f32.mrb[0].mxu0
        %574 = vmatprep.mubr.bf16.mxu0 0
        %575 = vmatmul.mubr.bf16.gmra.mrb[0].mxu0 %v500
        %v576 = vpop.f32.mrb[0].mxu0
        %v577 = vadd.f32 0.0, %v576
        %v578 = vpop.f32.mrb[0].mxu0
        %v579 = vpop.f32.mrb[0].mxu0
        %v580 = vadd.f32 0.0, %v579
        %v581 = vpop.f32.mrb[0].mxu0
        %582 = vmatprep.mubr.bf16.mxu0 0
        %583 = vmatmul.mubr.bf16.gmra.mrb[0].mxu0 %v503
        %v584 = vpop.f32.mrb[0].mxu0
        %v585 = vadd.f32 0.0, %v584
        %v586 = vpop.f32.mrb[0].mxu0
        %v587 = vpop.f32.mrb[0].mxu0
        %v588 = vadd.f32 0.0, %v587
        %v589 = vpop.f32.mrb[0].mxu0
        %590 = vmatprep.mubr.bf16.mxu0 0
        %591 = vmatmul.mubr.bf16.gmra.mrb[0].mxu0 %v506
        %v592 = vpop.f32.mrb[0].mxu0
        %v593 = vadd.f32 0.0, %v592
        %v594 = vpop.f32.mrb[0].mxu0
        %v595 = vpop.f32.mrb[0].mxu0
        %v596 = vadd.f32 0.0, %v595
        %v597 = vpop.f32.mrb[0].mxu0
        %598 = vmatprep.mubr.bf16.mxu0 0
        %599 = vmatmul.mubr.bf16.gmra.mrb[0].mxu0 %v509
        %v600 = vpop.f32.mrb[0].mxu0
        %v601 = vadd.f32 0.0, %v600
        %v602 = vpop.f32.mrb[0].mxu0
        %v603 = vpop.f32.mrb[0].mxu0
        %v604 = vadd.f32 0.0, %v603
        %v605 = vpop.f32.mrb[0].mxu0
        %606 = vmatprep.mubr.bf16.mxu0 0
        %607 = vmatmul.mubr.bf16.gmra.mrb[0].mxu0 %v512
        %v608 = vpop.f32.mrb[0].mxu0
        %v609 = vadd.f32 0.0, %v608
        %v610 = vpop.f32.mrb[0].mxu0
        %v611 = vpop.f32.mrb[0].mxu0
        %v612 = vadd.f32 0.0, %v611
        %v613 = vpop.f32.mrb[0].mxu0
        %614 = vdwg.mxu0
        %v615 = vadd.f32 %v455, %v553
        %v616 = vadd.f32 %v456, %v556
        %v617 = vadd.f32 %v457, %v561
        %v618 = vadd.f32 %v458, %v564
        %v619 = vadd.f32 %v459, %v569
        %v620 = vadd.f32 %v460, %v572
        %v621 = vadd.f32 %v461, %v577
        %v622 = vadd.f32 %v462, %v580
        %v623 = vadd.f32 %v463, %v585
        %v624 = vadd.f32 %v464, %v588
        %v625 = vadd.f32 %v465, %v593
        %v626 = vadd.f32 %v466, %v596
        %v627 = vadd.f32 %v467, %v601
        %v628 = vadd.f32 %v468, %v604
        %v629 = vadd.f32 %v469, %v609
        %v630 = vadd.f32 %v470, %v612
        %631 = vst [vmem:[#allocation2] sm:$0xff] %v615
        %632 = vst [vmem:[#allocation2 + $0x8] sm:$0xff] %v616
        %633 = vst [vmem:[#allocation2 + $0x10] sm:$0xff] %v617
        %634 = vst [vmem:[#allocation2 + $0x18] sm:$0xff] %v618
        %635 = vst [vmem:[#allocation2 + $0x20] sm:$0xff] %v619
        %636 = vst [vmem:[#allocation2 + $0x28] sm:$0xff] %v620
        %637 = vst [vmem:[#allocation2 + $0x30] sm:$0xff] %v621
        %638 = vst [vmem:[#allocation2 + $0x38] sm:$0xff] %v622
        %639 = vst [vmem:[#allocation2 + $0x40] sm:$0xff] %v623
        %640 = vst [vmem:[#allocation2 + $0x48] sm:$0xff] %v624
        %641 = vst [vmem:[#allocation2 + $0x50] sm:$0xff] %v625
        %642 = vst [vmem:[#allocation2 + $0x58] sm:$0xff] %v626
        %643 = vst [vmem:[#allocation2 + $0x60] sm:$0xff] %v627
        %644 = vst [vmem:[#allocation2 + $0x68] sm:$0xff] %v628
        %645 = vst [vmem:[#allocation2 + $0x70] sm:$0xff] %v629
        %646 = vst [vmem:[#allocation2 + $0x78] sm:$0xff] %v630
        %v647 = vld [vmem:[#allocation3] sm:$0x1]
        %v648 = vrot.slane %v453, 4
        %v649 = vadd.f32 %v453, %v648
        %v650 = vrot.slane %v649, 2
        %v651 = vadd.f32 %v649, %v650
        %v652 = vrot.slane %v651, 1
        %v653 = vadd.f32 %v651, %v652
        %v654 = vadd.f32 %v647, %v653
        %655 = vst [vmem:[#allocation3] sm:$0x1] %v654
        // Predicated region
        $region57: #{tpu_custom_call.1} parent=43 // pred_check
          %p656 = pneg %p419
        $region58: #{tpu_custom_call.1} parent=43 // pred_check_branch
          %658 = sbr.rel (%p656) target = $region60
        $region59: #{tpu_custom_call.1} parent=43 // pred_region
          %v659 = vld [vmem:[%s396] sm:$0xff]
          %vm660 = vcmp.gt.f32.partialorder %v659, 0.0
          %v661 = vadd.f32 %v659, 1.0
          %v662 = vmul.f32 %v659, 1.442695
          %v663 = vpow.pop %v662
          %v664 = vsel %vm660, %v661, %v663
          %v665 = vld [vmem:[%s410] sm:$0xff]
          %667 = vset.pattern.permute.xlu0 0
          %668 = vperm.xlu0 %667, %v665
          %v669 = vpop.permute.xlu0 %668
          %v671 = vmul.f32 %v664, %v669
          %v672 = vld [vmem:[#allocation4] sm:$0xf]
          %v673 = vld [vmem:[#allocation4 + $0x4] sm:$0xf]
          %v674 = vld [vmem:[#allocation4 + $0x8] sm:$0xf]
          %v675 = vld [vmem:[#allocation4 + $0xc] sm:$0xf]
          %v676 = vld [vmem:[#allocation4 + $0x10] sm:$0xf]
          %v677 = vld [vmem:[#allocation4 + $0x14] sm:$0xf]
          %v678 = vld [vmem:[#allocation4 + $0x18] sm:$0xf]
          %v679 = vld [vmem:[#allocation4 + $0x1c] sm:$0xf]
          %v680 = vld [vmem:[#allocation4 + $0x20] sm:$0xf]
          %v681 = vld [vmem:[#allocation4 + $0x24] sm:$0xf]
          %v682 = vld [vmem:[#allocation4 + $0x28] sm:$0xf]
          %v683 = vld [vmem:[#allocation4 + $0x2c] sm:$0xf]
          %v684 = vld [vmem:[#allocation4 + $0x30] sm:$0xf]
          %v685 = vld [vmem:[#allocation4 + $0x34] sm:$0xf]
          %v686 = vld [vmem:[#allocation4 + $0x38] sm:$0xf]
          %v687 = vld [vmem:[#allocation4 + $0x3c] sm:$0xf]
          %v688 = vld [vmem:[#allocation2] sm:$0xff]
          %v689 = vld [vmem:[#allocation2 + $0x8] sm:$0xff]
          %v690 = vld [vmem:[#allocation2 + $0x10] sm:$0xff]
          %v691 = vld [vmem:[#allocation2 + $0x18] sm:$0xff]
          %v692 = vld [vmem:[#allocation2 + $0x20] sm:$0xff]
          %v693 = vld [vmem:[#allocation2 + $0x28] sm:$0xff]
          %v694 = vld [vmem:[#allocation2 + $0x30] sm:$0xff]
          %v695 = vld [vmem:[#allocation2 + $0x38] sm:$0xff]
          %v696 = vld [vmem:[#allocation2 + $0x40] sm:$0xff]
          %v697 = vld [vmem:[#allocation2 + $0x48] sm:$0xff]
          %v698 = vld [vmem:[#allocation2 + $0x50] sm:$0xff]
          %v699 = vld [vmem:[#allocation2 + $0x58] sm:$0xff]
          %v700 = vld [vmem:[#allocation2 + $0x60] sm:$0xff]
          %v701 = vld [vmem:[#allocation2 + $0x68] sm:$0xff]
          %v702 = vld [vmem:[#allocation2 + $0x70] sm:$0xff]
          %v703 = vld [vmem:[#allocation2 + $0x78] sm:$0xff]
          %v704 = vpack.c.bf16 %v689, %v688
          %v705 = vpack.c.bf16 %v691, %v690
          %v706 = vpack.c.bf16 %v693, %v692
          %v707 = vpack.c.bf16 %v695, %v694
          %v708 = vpack.c.bf16 %v697, %v696
          %v709 = vpack.c.bf16 %v699, %v698
          %v710 = vpack.c.bf16 %v701, %v700
          %v711 = vpack.c.bf16 %v703, %v702
          %v728 = vunpack.c.l.b16 %v672
          %v729 = vunpack.c.l.b16 %v673
          %v730 = vunpack.c.l.b16 %v674
          %v731 = vunpack.c.l.b16 %v675
          %v732 = vunpack.c.l.b16 %v676
          %v733 = vunpack.c.l.b16 %v677
          %v734 = vunpack.c.l.b16 %v678
          %v735 = vunpack.c.l.b16 %v679
          %v736 = vunpack.c.l.b16 %v680
          %v737 = vunpack.c.l.b16 %v681
          %v738 = vunpack.c.l.b16 %v682
          %v739 = vunpack.c.l.b16 %v683
          %v740 = vunpack.c.l.b16 %v684
          %v741 = vunpack.c.l.b16 %v685
          %v742 = vunpack.c.l.b16 %v686
          %v743 = vunpack.c.l.b16 %v687
          %v744 = vpack.c.b16 %v729, %v728
          %v745 = vpack.c.b16 %v731, %v730
          %v746 = vpack.c.b16 %v733, %v732
          %v747 = vpack.c.b16 %v735, %v734
          %v748 = vpack.c.b16 %v737, %v736
          %v749 = vpack.c.b16 %v739, %v738
          %v750 = vpack.c.b16 %v741, %v740
          %v751 = vpack.c.b16 %v743, %v742
          %v760 = vmul.bf16 %v704, %v744
          %v761 = vmul.bf16 %v705, %v745
          %v762 = vmul.bf16 %v706, %v746
          %v763 = vmul.bf16 %v707, %v747
          %v764 = vmul.bf16 %v708, %v748
          %v765 = vmul.bf16 %v709, %v749
          %v766 = vmul.bf16 %v710, %v750
          %v767 = vmul.bf16 %v711, %v751
          %v768 = vpack.c.bf16 %v671, %v671
          %769 = vmatprep.subr.bf16.mxu0 0
          %770 = vmatpush1.bf16.msra.mxu0 %v760
          %771 = vmatprep.subr.bf16.mxu0 0
          %772 = vmatpush1.bf16.msra.mxu0 %v761
          %773 = vmatprep.subr.bf16.mxu0 0
          %774 = vmatpush1.bf16.msra.mxu0 %v762
          %775 = vmatprep.subr.bf16.mxu0 0
          %776 = vmatpush1.bf16.msra.mxu0 %v763
          %777 = vmatprep.subr.bf16.mxu0 0
          %778 = vmatpush1.bf16.msra.mxu0 %v764
          %779 = vmatprep.subr.bf16.mxu0 0
          %780 = vmatpush1.bf16.msra.mxu0 %v765
          %781 = vmatprep.subr.bf16.mxu0 0
          %782 = vmatpush1.bf16.msra.mxu0 %v766
          %783 = vmatprep.subr.bf16.mxu0 0
          %784 = vmatpush1.bf16.msra.mxu0 %v767
          %785 = vmatprep.subr.bf16.mxu0 0
          %786 = vmatpush1.bf16.msra.mxu0 0
          %787 = vmatprep.subr.bf16.mxu0 0
          %788 = vmatpush1.bf16.msra.mxu0 0
          %789 = vmatprep.subr.bf16.mxu0 0
          %790 = vmatpush1.bf16.msra.mxu0 0
          %791 = vmatprep.subr.bf16.mxu0 0
          %792 = vmatpush1.bf16.msra.mxu0 0
          %793 = vmatprep.subr.bf16.mxu0 0
          %794 = vmatpush1.bf16.msra.mxu0 0
          %795 = vmatprep.subr.bf16.mxu0 0
          %796 = vmatpush1.bf16.msra.mxu0 0
          %797 = vmatprep.subr.bf16.mxu0 0
          %798 = vmatpush1.bf16.msra.mxu0 0
          %799 = vmatprep.subr.bf16.mxu0 0
          %800 = vmatpush1.bf16.msra.mxu0 0
          %801 = vmatprep.mubr.bf16.mxu0 0
          %802 = vmatmul.mubr.bf16.gmra.mrb[0].mxu0 %v768
          %v803 = vpop.f32.mrb[0].mxu0
          %v804 = vadd.f32 0.0, %v803
          %v805 = vpop.f32.mrb[0].mxu0
          %v806 = vpop.f32.mrb[0].mxu0
          %v807 = vpop.f32.mrb[0].mxu0
          %808 = vdwg.mxu0
          %v809 = vld [vmem:[#allocation3] sm:$0x1]
          %v811 = vlaneseq
          %v812 = vshrl.u32 %v811, 7
          %v813 = vsub.s32 0, %v812
          %v814 = vrot.slane %v809, %v813
          %v816 = vmul.f32 %v671, %v814
          %v817 = vpack.c.bf16 %v816, %v816
          %818 = vmatprep.subr.bf16.mxu0 0
          %819 = vmatpush1.bf16.msra.mxu0 %v744
          %820 = vmatprep.subr.bf16.mxu0 0
          %821 = vmatpush1.bf16.msra.mxu0 %v745
          %822 = vmatprep.subr.bf16.mxu0 0
          %823 = vmatpush1.bf16.msra.mxu0 %v746
          %824 = vmatprep.subr.bf16.mxu0 0
          %825 = vmatpush1.bf16.msra.mxu0 %v747
          %826 = vmatprep.subr.bf16.mxu0 0
          %827 = vmatpush1.bf16.msra.mxu0 %v748
          %828 = vmatprep.subr.bf16.mxu0 0
          %829 = vmatpush1.bf16.msra.mxu0 %v749
          %830 = vmatprep.subr.bf16.mxu0 0
          %831 = vmatpush1.bf16.msra.mxu0 %v750
          %832 = vmatprep.subr.bf16.mxu0 0
          %833 = vmatpush1.bf16.msra.mxu0 %v751
          %834 = vmatprep.subr.bf16.mxu0 0
          %835 = vmatpush1.bf16.msra.mxu0 0
          %836 = vmatprep.subr.bf16.mxu0 0
          %837 = vmatpush1.bf16.msra.mxu0 0
          %838 = vmatprep.subr.bf16.mxu0 0
          %839 = vmatpush1.bf16.msra.mxu0 0
          %840 = vmatprep.subr.bf16.mxu0 0
          %841 = vmatpush1.bf16.msra.mxu0 0
          %842 = vmatprep.subr.bf16.mxu0 0
          %843 = vmatpush1.bf16.msra.mxu0 0
          %844 = vmatprep.subr.bf16.mxu0 0
          %845 = vmatpush1.bf16.msra.mxu0 0
          %846 = vmatprep.subr.bf16.mxu0 0
          %847 = vmatpush1.bf16.msra.mxu0 0
          %848 = vmatprep.subr.bf16.mxu0 0
          %849 = vmatpush1.bf16.msra.mxu0 0
          %850 = vmatprep.mubr.bf16.mxu0 0
          %851 = vmatmul.mubr.bf16.gmra.mrb[0].mxu0 %v817
          %v852 = vpop.f32.mrb[0].mxu0
          %v853 = vadd.f32 1e-06, %v852
          %v854 = vpop.f32.mrb[0].mxu0
          %v855 = vpop.f32.mrb[0].mxu0
          %v856 = vpop.f32.mrb[0].mxu0
          %857 = vdwg.mxu0
          %v858 = vrcp.pop %v853
          %v859 = vmul.f32 %v804, %v858
          %860 = vst [vmem:[%s389] sm:$0xff] %v859
        $region60: #{tpu_custom_call.1} parent=43 // pred_fallthru
          _
        %s861 = sand.u32 %s214, 1
        %s862 = scalar_lea.sflag [#allocation6], %s861
        %s863 = sand.u32 %s214, 1
        %s864 = smul.addr %s863, 8
        %s865 = scalar_lea.vmem [#allocation9], %s864
        // Predicated region
        $region61: #{tpu_custom_call.1} parent=43 // pred_check
          %p866 = pneg %p224
        $region62: #{tpu_custom_call.1} parent=43 // pred_check_branch
          %868 = sbr.rel (%p866) target = $region64
        $region63: #{tpu_custom_call.1} parent=43 // pred_region
          %s870 = ssub.s32 128, 128
          %871 = vsyncadd %s862, %s870
          %s872 = sadd.s32 %s30, %s29
          %s873 = smul.addr %s872, 128
          %s874 = scalar_lea.hbm %s6, %s873
          %s876 = sshll.u32 %s865, 4
          %s877 = int_to_ptr.vmem [resolvable:$true] %s876
          %879 = dma.vmem_to_hbm [thread:$0]  %s877, 128, %s874, %s862
        $region64: #{tpu_custom_call.1} parent=43 // pred_fallthru
          _
      $region44: #{tpu_custom_call.1} parent=5 // pred_fallthru
        _
      %p880 = scmp.le.s32.totalorder 2, %s19
      // Predicated region
      $region65: #{tpu_custom_call.1} parent=5 // pred_check
        %p881 = pneg %p880
      $region66: #{tpu_custom_call.1} parent=5 // pred_check_branch
        %883 = sbr.rel (%p881) target = $region68
      $region67: #{tpu_custom_call.1} parent=5 // pred_region
        %s884 = ssub.s32 %s19, 2
        // Predicated region
        $region69: #{tpu_custom_call.1} parent=67 // pred_check
          %p885 = pneg %p230
        $region70: #{tpu_custom_call.1} parent=67 // pred_check_branch
          %887 = sbr.rel (%p885) target = $region72
        $region71: #{tpu_custom_call.1} parent=67 // pred_region
          %s888 = sand.u32 %s215, 1
          %s889 = scalar_lea.sflag [#allocation6], %s888
          %s890 = sand.u32 %s215, 1
          %s891 = smul.addr %s890, 8
          %s892 = scalar_lea.vmem [#allocation9], %s891
          %893 = dma.done %s889, 128
        $region72: #{tpu_custom_call.1} parent=67 // pred_fallthru
          _
      $region68: #{tpu_custom_call.1} parent=5 // pred_fallthru
        _
    $region6: #{tpu_custom_call.1} parent=1 // loop_footer
      %s23 = sadd.s32 1, %s19
    $region7: #{tpu_custom_call.1} parent=1 // loop_footer_branch
      %18 = sbr.rel target = $region3
    $region8: #{tpu_custom_call.1} parent=1 // loop_exit
      _
    %894 = vsyncpa [#allocation5], 1
    %s895 = scalar_lea.sflag [#allocation5], 1
    %896 = vsyncpa %s895, 1
    %897 = vsyncpa [#allocation8], 1
    %s898 = scalar_lea.sflag [#allocation8], 1
    %899 = vsyncpa %s898, 1
    %900 = vsyncpa [#allocation6], 1
    %s901 = scalar_lea.sflag [#allocation6], 1
    %902 = vsyncpa %s901, 1

</llo_original>
